<compile_context>
chip_gen: v7x
topology: tpu7x:2x2x1
jax: 0.10.0
libtpu: 0.0.40
codegen_flags: <defaults>
</compile_context>

<pallas_src>
import functools

import jax
import jax.numpy as jnp
from jax.experimental import pallas as pl
from jax.experimental.pallas import tpu as pltpu

# ---------------- cfg (synthetic, deterministic) ----------------
NUM_CLASSES = 8                       # cfg.MODEL.ROI_HEADS.NUM_CLASSES
IOU_THRESHOLDS = (0.5,)               # cfg.MODEL.ROI_HEADS.IOU_THRESHOLDS
IOU_LABELS = (0, 1)                   # cfg.MODEL.ROI_HEADS.IOU_LABELS
BATCH_SIZE_PER_IMAGE = 32             # cfg.MODEL.ROI_HEADS.BATCH_SIZE_PER_IMAGE
POSITIVE_FRACTION = 0.25              # cfg.MODEL.ROI_HEADS.POSITIVE_FRACTION

_CLS_BITS = 8                         # gt class packed into low 8 bits of arg-min key
_CLS_MASK = (1 << _CLS_BITS) - 1      # plain Python ints -> jaxpr literals,
_BIG = 1 << 30                        # never captured-constant device arrays


def _round_up(x, m):
    return ((x + m - 1) // m) * m


def _roi_match_kernel(m_ref, gt_ref, prop_ref, cls_ref, out_ref,
                      *, num_classes, thresholds, labels):
    """One grid step (image b, proposal tile j): IoU + matcher + class gather.

    m_ref    : (B,)            i32 SMEM  real gt count per image (scalar prefetch)
    gt_ref   : (1, Mp, 4)      f32 VMEM  gt boxes (xyxy), padded rows are zero
    prop_ref : (1, 4, T)       f32 VMEM  proposal boxes (xyxy), coords on sublanes
    cls_ref  : (1, Mp, 1)      i32 VMEM  gt classes
    out_ref  : (1, 8, T)       i32 VMEM  row 0: matched gt index
                                         row 1: matcher label (IOU_LABELS)
                                         row 2: class target ([0,C), C=bg, -1=ignore)
                                         rows 3-7: zero padding (lane-dense store)
    """
    b = pl.program_id(0)
    m_real = m_ref[b]                                  # runtime scalar, no retrace

    gb = gt_ref[0]                                     # (Mp, 4)
    pb = prop_ref[0]                                   # (4, T)
    cls = cls_ref[0]                                   # (Mp, 1)

    x1g, y1g, x2g, y2g = gb[:, 0:1], gb[:, 1:2], gb[:, 2:3], gb[:, 3:4]  # (Mp,1)
    x1p, y1p, x2p, y2p = pb[0:1, :], pb[1:2, :], pb[2:3, :], pb[3:4, :]  # (1,T)

    area_g = (x2g - x1g) * (y2g - y1g)                 # (Mp, 1)
    area_p = (x2p - x1p) * (y2p - y1p)                 # (1, T)

    # pairwise intersection / IoU (detectron2.pairwise_iou semantics)
    iw = jnp.maximum(jnp.minimum(x2g, x2p) - jnp.maximum(x1g, x1p), 0.0)  # (Mp,T)
    ih = jnp.maximum(jnp.minimum(y2g, y2p) - jnp.maximum(y1g, y1p), 0.0)
    inter = iw * ih
    union = area_g + area_p - inter
    # guard the denominator so padded zero-area rows never hit 0/0 before the mask
    safe_union = jnp.where(inter > 0.0, union, 1.0)
    iou = jnp.where(inter > 0.0, inter / safe_union, 0.0)                 # (Mp,T)

    # mask padded gt rows so they never win the max
    m_iota = jax.lax.broadcasted_iota(jnp.int32, iou.shape, 0)            # (Mp,T)
    iou = jnp.where(m_iota < m_real, iou, -1.0)

    # Matcher (first-argmax over gt axis) with the class gather fused in:
    # pack (gt_index << 8) | gt_class and take ONE cross-sublane min.
    max_val = jnp.max(iou, axis=0, keepdims=True)                         # (1,T)
    is_max = iou == max_val
    packed = (m_iota << _CLS_BITS) | cls                                  # (Mp,T)
    cand = jnp.where(is_max, packed, _BIG)
    cand_min = jnp.min(cand, axis=0, keepdims=True)                       # (1,T)
    matched_idx = cand_min >> _CLS_BITS
    gathered = cand_min & _CLS_MASK                                       # gt class

    # threshold -> label (intervals [-inf,t0), [t0,t1), ..., [t_last,inf))
    label = jnp.full(max_val.shape, labels[0], jnp.int32)
    for thr, lab in zip(thresholds, labels[1:]):
        label = jnp.where(max_val >= thr, lab, label)

    # _sample_proposals label assignment (pre-subsampling)
    pcls = jnp.where(label == 0, num_classes, gathered)
    pcls = jnp.where(label == -1, -1, pcls)

    # single lane-dense (8, T) store: rows 0..2 carry results, rows 3..7 zero
    t = max_val.shape[1]
    row = jax.lax.broadcasted_iota(jnp.int32, (8, t), 0)
    out = jnp.where(row == 0, jnp.broadcast_to(matched_idx, (8, t)), 0)
    out = jnp.where(row == 1, jnp.broadcast_to(label, (8, t)), out)
    out = jnp.where(row == 2, jnp.broadcast_to(pcls, (8, t)), out)
    out_ref[0] = out.astype(jnp.int32)


@jax.jit
def roi_label_proposals(gt_boxes, gt_classes, num_gt, proposal_boxes):
    """Batched labeling of proposals against gt.

    Args:
      gt_boxes       : (B, M, 4) f32  padded gt boxes (rows >= num_gt[b] ignored)
      gt_classes     : (B, M)    i32  padded gt classes
      num_gt         : (B,)      i32  real gt count per image
      proposal_boxes : (B, N, 4) f32  proposals per image

    Returns (matched_idxs, matched_labels, proposal_gt_classes), each (B, N) i32.
    """
    B, M, _ = gt_boxes.shape
    _, N, _ = proposal_boxes.shape

    Mp = _round_up(max(M, 1), 8)
    Np0 = _round_up(max(N, 1), 128)
    if Np0 <= 1024:                     # lane-wide tiles (>=1024) for realistic RPN N
        tile_n, Np = Np0, Np0
    else:
        tile_n = 1024
        Np = _round_up(Np0, tile_n)
    n_tiles = Np // tile_n

    # Layout / padding inside the same jit as the kernel so XLA fuses it
    # (no standalone host-side pad / scatter / transpose ops).
    gt_p = jnp.zeros((B, Mp, 4), jnp.float32).at[:, :M, :].set(
        gt_boxes.astype(jnp.float32))
    cls_p = jnp.zeros((B, Mp, 1), jnp.int32).at[:, :M, 0].set(
        gt_classes.astype(jnp.int32))
    prop_p = jnp.zeros((B, 4, Np), jnp.float32).at[:, :, :N].set(
        jnp.swapaxes(proposal_boxes.astype(jnp.float32), 1, 2))

    kernel = functools.partial(
        _roi_match_kernel,
        num_classes=NUM_CLASSES,
        thresholds=IOU_THRESHOLDS,
        labels=IOU_LABELS,
    )

    grid_spec = pltpu.PrefetchScalarGridSpec(
        num_scalar_prefetch=1,                     # num_gt -> SMEM, runtime scalar
        grid=(B, n_tiles),
        in_specs=[
            pl.BlockSpec((1, Mp, 4), lambda b, j, m: (b, 0, 0)),      # gt boxes
            pl.BlockSpec((1, 4, tile_n), lambda b, j, m: (b, 0, j)),  # proposals
            pl.BlockSpec((1, Mp, 1), lambda b, j, m: (b, 0, 0)),      # gt classes
        ],
        out_specs=pl.BlockSpec((1, 8, tile_n), lambda b, j, m: (b, 0, j)),
    )

    out = pl.pallas_call(
        kernel,
        grid_spec=grid_spec,
        out_shape=jax.ShapeDtypeStruct((B, 8, Np), jnp.int32),
        compiler_params=pltpu.CompilerParams(
            dimension_semantics=("parallel", "parallel")),
    )(num_gt.astype(jnp.int32), gt_p, prop_p, cls_p)

    return out[:, 0, :N], out[:, 1, :N], out[:, 2, :N]


def _reference_single(gt_boxes, gt_classes, proposal_boxes):
    """Pure-JAX reference of pairwise_iou + Matcher + _sample_proposals labeling."""
    x1g, y1g, x2g, y2g = [gt_boxes[:, i:i + 1] for i in range(4)]
    x1p, y1p, x2p, y2p = [proposal_boxes[None, :, i] for i in range(4)]
    area_g = (x2g - x1g) * (y2g - y1g)
    area_p = (x2p - x1p) * (y2p - y1p)
    iw = jnp.maximum(jnp.minimum(x2g, x2p) - jnp.maximum(x1g, x1p), 0.0)
    ih = jnp.maximum(jnp.minimum(y2g, y2p) - jnp.maximum(y1g, y1p), 0.0)
    inter = iw * ih
    union = area_g + area_p - inter
    iou = jnp.where(inter > 0.0, inter / jnp.where(inter > 0.0, union, 1.0), 0.0)
    max_val = iou.max(axis=0)
    midx = jnp.argmax(iou, axis=0).astype(jnp.int32)
    label = jnp.full(max_val.shape, IOU_LABELS[0], jnp.int32)
    for thr, lab in zip(IOU_THRESHOLDS, IOU_LABELS[1:]):
        label = jnp.where(max_val >= thr, jnp.int32(lab), label)
    pcls = gt_classes[midx]
    pcls = jnp.where(label == 0, NUM_CLASSES, pcls)
    pcls = jnp.where(label == -1, -1, pcls)
    return midx, label, pcls.astype(jnp.int32)


if __name__ == "__main__":
    key = jax.random.PRNGKey(0)

    B, N, M_CAP = 2, 120, 8                       # 2 images, 120 proposals each
    num_gt = jnp.array([5, 3], jnp.int32)         # per-image gt count (runtime scalar)

    def make_boxes(k, n):
        kc, ks = jax.random.split(k)
        ctr = jax.random.uniform(kc, (n, 2), minval=8.0, maxval=56.0)
        wh = jax.random.uniform(ks, (n, 2), minval=4.0, maxval=24.0)
        return jnp.concatenate([ctr - wh / 2.0, ctr + wh / 2.0], axis=1)

    keys = jax.random.split(key, 2 * B + 1)
    gt_boxes = jnp.zeros((B, M_CAP, 4), jnp.float32)
    proposal_boxes = jnp.zeros((B, N, 4), jnp.float32)
    for b in range(B):
        m = int(num_gt[b])
        gt_boxes = gt_boxes.at[b, :m].set(make_boxes(keys[2 * b], m))
        proposal_boxes = proposal_boxes.at[b].set(make_boxes(keys[2 * b + 1], N))
    gt_classes = jax.random.randint(keys[-1], (B, M_CAP), 0, NUM_CLASSES,
                                    dtype=jnp.int32)

    midx, mlab, pcls = roi_label_proposals(gt_boxes, gt_classes, num_gt,
                                           proposal_boxes)
    jax.block_until_ready((midx, mlab, pcls))

    # correctness check against pure-JAX reference (per image, unpadded gt)
    for b in range(B):
        m = int(num_gt[b])
        r_midx, r_mlab, r_pcls = _reference_single(
            gt_boxes[b, :m], gt_classes[b, :m], proposal_boxes[b])
        assert bool(jnp.all(midx[b] == r_midx)), f"matched_idxs mismatch (img {b})"
        assert bool(jnp.all(mlab[b] == r_mlab)), f"matched_labels mismatch (img {b})"
        assert bool(jnp.all(pcls[b] == r_pcls)), f"gt_classes mismatch (img {b})"

    # TODO(synk): subsample_labels uses torch.randperm (random fg/bg sampling) with
    # no clean Pallas equivalent; deterministic stand-in picks lowest-index fg then
    # bg proposals per image.
    for b in range(B):
        is_fg = (pcls[b] >= 0) & (pcls[b] < NUM_CLASSES)
        order = jnp.argsort(jnp.where(is_fg, 0, 1) * N + jnp.arange(N))
        sampled_idxs = order[:BATCH_SIZE_PER_IMAGE]
        sampled_cls = pcls[b, sampled_idxs]
        jax.block_until_ready((sampled_idxs, sampled_cls))

    print("KERNEL_OK")
</pallas_src>

<mosaic_0001>
module attributes {stable_mosaic.version = 11 : i64} {
  func.func @_roi_match_kernel(%arg0: i32, %arg1: i32, %arg2: memref<2xi32, #tpu.memory_space<smem>>, %arg3: memref<1x8x4xf32, #tpu.memory_space<vmem>>, %arg4: memref<1x4x128xf32, #tpu.memory_space<vmem>>, %arg5: memref<1x8x1xi32, #tpu.memory_space<vmem>>, %arg6: memref<1x8x128xi32, #tpu.memory_space<vmem>>) attributes {dimension_semantics = [#tpu.dimension_semantics<parallel>, #tpu.dimension_semantics<parallel>], iteration_bounds = array<i64: 2, 1>, scalar_prefetch = 1 : i64, scratch_operands = 0 : i64, tpu.core_type = #tpu.core_type<tc>, window_params = [{transform_indices = @transform_0, window_bounds = array<i64: 1, 8, 4>}, {transform_indices = @transform_1, window_bounds = array<i64: 1, 4, 128>}, {transform_indices = @transform_2, window_bounds = array<i64: 1, 8, 1>}, {transform_indices = @transform_3, window_bounds = array<i64: 1, 8, 128>}]} {
    %0 = arith.index_cast %arg0 : i32 to index
    %1 = memref.load %arg2[%0] : memref<2xi32, #tpu.memory_space<smem>>
    %c0 = arith.constant 0 : index
    %c0_0 = arith.constant 0 : index
    %c0_1 = arith.constant 0 : index
    %2 = vector.load %arg3[%c0, %c0_0, %c0_1] : memref<1x8x4xf32, #tpu.memory_space<vmem>>, vector<1x8x4xf32>
    %3 = vector.shape_cast %2 : vector<1x8x4xf32> to vector<8x4xf32>
    %c0_2 = arith.constant 0 : index
    %c0_3 = arith.constant 0 : index
    %c0_4 = arith.constant 0 : index
    %4 = vector.load %arg4[%c0_2, %c0_3, %c0_4] : memref<1x4x128xf32, #tpu.memory_space<vmem>>, vector<1x4x128xf32>
    %5 = vector.shape_cast %4 : vector<1x4x128xf32> to vector<4x128xf32>
    %c0_5 = arith.constant 0 : index
    %c0_6 = arith.constant 0 : index
    %c0_7 = arith.constant 0 : index
    %6 = vector.load %arg5[%c0_5, %c0_6, %c0_7] : memref<1x8x1xi32, #tpu.memory_space<vmem>>, vector<1x8x1xi32>
    %7 = vector.shape_cast %6 : vector<1x8x1xi32> to vector<8x1xi32>
    %8 = vector.extract_strided_slice %3 {offsets = [0, 0], sizes = [8, 1], strides = [1, 1]} : vector<8x4xf32> to vector<8x1xf32>
    %9 = vector.extract_strided_slice %3 {offsets = [0, 1], sizes = [8, 1], strides = [1, 1]} : vector<8x4xf32> to vector<8x1xf32>
    %10 = vector.extract_strided_slice %3 {offsets = [0, 2], sizes = [8, 1], strides = [1, 1]} : vector<8x4xf32> to vector<8x1xf32>
    %11 = vector.extract_strided_slice %3 {offsets = [0, 3], sizes = [8, 1], strides = [1, 1]} : vector<8x4xf32> to vector<8x1xf32>
    %12 = vector.extract_strided_slice %5 {offsets = [0, 0], sizes = [1, 128], strides = [1, 1]} : vector<4x128xf32> to vector<1x128xf32>
    %13 = vector.extract_strided_slice %5 {offsets = [1, 0], sizes = [1, 128], strides = [1, 1]} : vector<4x128xf32> to vector<1x128xf32>
    %14 = vector.extract_strided_slice %5 {offsets = [2, 0], sizes = [1, 128], strides = [1, 1]} : vector<4x128xf32> to vector<1x128xf32>
    %15 = vector.extract_strided_slice %5 {offsets = [3, 0], sizes = [1, 128], strides = [1, 1]} : vector<4x128xf32> to vector<1x128xf32>
    %16 = arith.subf %10, %8 : vector<8x1xf32>
    %17 = arith.subf %11, %9 : vector<8x1xf32>
    %18 = arith.mulf %16, %17 : vector<8x1xf32>
    %19 = arith.subf %14, %12 : vector<1x128xf32>
    %20 = arith.subf %15, %13 : vector<1x128xf32>
    %21 = arith.mulf %19, %20 : vector<1x128xf32>
    %22 = vector.broadcast %10 : vector<8x1xf32> to vector<8x128xf32>
    %23 = vector.broadcast %14 : vector<1x128xf32> to vector<8x128xf32>
    %24 = arith.minimumf %22, %23 : vector<8x128xf32>
    %25 = vector.broadcast %8 : vector<8x1xf32> to vector<8x128xf32>
    %26 = vector.broadcast %12 : vector<1x128xf32> to vector<8x128xf32>
    %27 = arith.maximumf %25, %26 : vector<8x128xf32>
    %28 = arith.subf %24, %27 : vector<8x128xf32>
    %cst = arith.constant 0.000000e+00 : f32
    %29 = vector.broadcast %cst : f32 to vector<8x128xf32>
    %30 = arith.maximumf %28, %29 : vector<8x128xf32>
    %31 = vector.broadcast %11 : vector<8x1xf32> to vector<8x128xf32>
    %32 = vector.broadcast %15 : vector<1x128xf32> to vector<8x128xf32>
    %33 = arith.minimumf %31, %32 : vector<8x128xf32>
    %34 = vector.broadcast %9 : vector<8x1xf32> to vector<8x128xf32>
    %35 = vector.broadcast %13 : vector<1x128xf32> to vector<8x128xf32>
    %36 = arith.maximumf %34, %35 : vector<8x128xf32>
    %37 = arith.subf %33, %36 : vector<8x128xf32>
    %cst_8 = arith.constant 0.000000e+00 : f32
    %38 = vector.broadcast %cst_8 : f32 to vector<8x128xf32>
    %39 = arith.maximumf %37, %38 : vector<8x128xf32>
    %40 = arith.mulf %30, %39 : vector<8x128xf32>
    %41 = vector.broadcast %18 : vector<8x1xf32> to vector<8x128xf32>
    %42 = vector.broadcast %21 : vector<1x128xf32> to vector<8x128xf32>
    %43 = arith.addf %41, %42 : vector<8x128xf32>
    %44 = arith.subf %43, %40 : vector<8x128xf32>
    %cst_9 = arith.constant 0.000000e+00 : f32
    %45 = vector.broadcast %cst_9 : f32 to vector<8x128xf32>
    %46 = arith.cmpf ogt, %40, %45 : vector<8x128xf32>
    %cst_10 = arith.constant 1.000000e+00 : f32
    %47 = vector.broadcast %cst_10 : f32 to vector<8x128xf32>
    %48 = arith.select %46, %44, %47 : vector<8x128xi1>, vector<8x128xf32>
    %cst_11 = arith.constant 0.000000e+00 : f32
    %49 = vector.broadcast %cst_11 : f32 to vector<8x128xf32>
    %50 = arith.cmpf ogt, %40, %49 : vector<8x128xf32>
    %51 = arith.divf %40, %48 : vector<8x128xf32>
    %cst_12 = arith.constant 0.000000e+00 : f32
    %52 = vector.broadcast %cst_12 : f32 to vector<8x128xf32>
    %53 = arith.select %50, %51, %52 : vector<8x128xi1>, vector<8x128xf32>
    %54 = tpu.iota {dimensions = array<i32: 0>} : vector<8x128xi32>
    %55 = vector.broadcast %1 : i32 to vector<8x128xi32>
    %56 = arith.cmpi slt, %54, %55 : vector<8x128xi32>
    %cst_13 = arith.constant -1.000000e+00 : f32
    %57 = vector.broadcast %cst_13 : f32 to vector<8x128xf32>
    %58 = arith.select %56, %53, %57 : vector<8x128xi1>, vector<8x128xf32>
    %cst_14 = arith.constant dense<0xFF800000> : vector<128xf32>
    %59 = vector.multi_reduction <maximumf>, %58, %cst_14 [0] : vector<8x128xf32> to vector<128xf32>
    %60 = vector.shape_cast %59 : vector<128xf32> to vector<1x128xf32>
    %61 = vector.broadcast %60 : vector<1x128xf32> to vector<8x128xf32>
    %62 = arith.cmpf oeq, %58, %61 : vector<8x128xf32>
    %c8_i32 = arith.constant 8 : i32
    %63 = vector.broadcast %c8_i32 : i32 to vector<8x128xi32>
    %64 = arith.shli %54, %63 : vector<8x128xi32>
    %65 = vector.broadcast %7 : vector<8x1xi32> to vector<8x128xi32>
    %66 = arith.ori %64, %65 : vector<8x128xi32>
    %c1073741824_i32 = arith.constant 1073741824 : i32
    %67 = vector.broadcast %c1073741824_i32 : i32 to vector<8x128xi32>
    %68 = arith.select %62, %66, %67 : vector<8x128xi1>, vector<8x128xi32>
    %cst_15 = arith.constant dense<2147483647> : vector<128xi32>
    %69 = vector.multi_reduction <minsi>, %68, %cst_15 [0] : vector<8x128xi32> to vector<128xi32>
    %70 = vector.shape_cast %69 : vector<128xi32> to vector<1x128xi32>
    %c8_i32_16 = arith.constant 8 : i32
    %71 = vector.broadcast %c8_i32_16 : i32 to vector<1x128xi32>
    %72 = arith.shrsi %70, %71 : vector<1x128xi32>
    %c255_i32 = arith.constant 255 : i32
    %73 = vector.broadcast %c255_i32 : i32 to vector<1x128xi32>
    %74 = arith.andi %70, %73 : vector<1x128xi32>
    %c0_i32 = arith.constant 0 : i32
    %75 = vector.broadcast %c0_i32 : i32 to vector<1x128xi32>
    %cst_17 = arith.constant 5.000000e-01 : f32
    %76 = vector.broadcast %cst_17 : f32 to vector<1x128xf32>
    %77 = arith.cmpf oge, %60, %76 : vector<1x128xf32>
    %c1_i32 = arith.constant 1 : i32
    %78 = vector.broadcast %c1_i32 : i32 to vector<1x128xi32>
    %79 = arith.select %77, %78, %75 : vector<1x128xi1>, vector<1x128xi32>
    %c0_i32_18 = arith.constant 0 : i32
    %80 = vector.broadcast %c0_i32_18 : i32 to vector<1x128xi32>
    %81 = arith.cmpi eq, %79, %80 : vector<1x128xi32>
    %c8_i32_19 = arith.constant 8 : i32
    %82 = vector.broadcast %c8_i32_19 : i32 to vector<1x128xi32>
    %83 = arith.select %81, %82, %74 : vector<1x128xi1>, vector<1x128xi32>
    %c-1_i32 = arith.constant -1 : i32
    %84 = vector.broadcast %c-1_i32 : i32 to vector<1x128xi32>
    %85 = arith.cmpi eq, %79, %84 : vector<1x128xi32>
    %c-1_i32_20 = arith.constant -1 : i32
    %86 = vector.broadcast %c-1_i32_20 : i32 to vector<1x128xi32>
    %87 = arith.select %85, %86, %83 : vector<1x128xi1>, vector<1x128xi32>
    %88 = tpu.iota {dimensions = array<i32: 0>} : vector<8x128xi32>
    %c0_i32_21 = arith.constant 0 : i32
    %89 = vector.broadcast %c0_i32_21 : i32 to vector<8x128xi32>
    %90 = arith.cmpi eq, %88, %89 : vector<8x128xi32>
    %91 = vector.shape_cast %72 : vector<1x128xi32> to vector<1x128xi32>
    %92 = vector.broadcast %91 : vector<1x128xi32> to vector<8x128xi32>
    %c0_i32_22 = arith.constant 0 : i32
    %93 = vector.broadcast %c0_i32_22 : i32 to vector<8x128xi32>
    %94 = arith.select %90, %92, %93 : vector<8x128xi1>, vector<8x128xi32>
    %c1_i32_23 = arith.constant 1 : i32
    %95 = vector.broadcast %c1_i32_23 : i32 to vector<8x128xi32>
    %96 = arith.cmpi eq, %88, %95 : vector<8x128xi32>
    %97 = vector.shape_cast %79 : vector<1x128xi32> to vector<1x128xi32>
    %98 = vector.broadcast %97 : vector<1x128xi32> to vector<8x128xi32>
    %99 = arith.select %96, %98, %94 : vector<8x128xi1>, vector<8x128xi32>
    %c2_i32 = arith.constant 2 : i32
    %100 = vector.broadcast %c2_i32 : i32 to vector<8x128xi32>
    %101 = arith.cmpi eq, %88, %100 : vector<8x128xi32>
    %102 = vector.shape_cast %87 : vector<1x128xi32> to vector<1x128xi32>
    %103 = vector.broadcast %102 : vector<1x128xi32> to vector<8x128xi32>
    %104 = arith.select %101, %103, %99 : vector<8x128xi1>, vector<8x128xi32>
    %c0_24 = arith.constant 0 : index
    %c0_25 = arith.constant 0 : index
    %c0_26 = arith.constant 0 : index
    %105 = vector.load %arg6[%c0_24, %c0_25, %c0_26] : memref<1x8x128xi32, #tpu.memory_space<vmem>>, vector<1x8x128xi32>
    %106 = vector.shape_cast %105 : vector<1x8x128xi32> to vector<8x128xi32>
    %107 = vector.shape_cast %104 : vector<8x128xi32> to vector<1x8x128xi32>
    tpu.vector_store %arg6[%c0_24, %c0_25, %c0_26], %107 {strides = array<i32>} : memref<1x8x128xi32, #tpu.memory_space<vmem>>, vector<1x8x128xi32>,
    return
  }
  func.func @transform_0(%arg0: i32, %arg1: i32, %arg2: memref<2xi32, #tpu.memory_space<smem>>) -> (i32, i32, i32) {
    %c0_i32 = arith.constant 0 : i32
    %c0_i32_0 = arith.constant 0 : i32
    %c0_i32_1 = arith.constant 0 : i32
    return %arg0, %c0_i32, %c0_i32_0 : i32, i32, i32
  }
  func.func @transform_1(%arg0: i32, %arg1: i32, %arg2: memref<2xi32, #tpu.memory_space<smem>>) -> (i32, i32, i32) {
    %c0_i32 = arith.constant 0 : i32
    %c0_i32_0 = arith.constant 0 : i32
    return %arg0, %c0_i32, %arg1 : i32, i32, i32
  }
  func.func @transform_2(%arg0: i32, %arg1: i32, %arg2: memref<2xi32, #tpu.memory_space<smem>>) -> (i32, i32, i32) {
    %c0_i32 = arith.constant 0 : i32
    %c0_i32_0 = arith.constant 0 : i32
    %c0_i32_1 = arith.constant 0 : i32
    return %arg0, %c0_i32, %c0_i32_0 : i32, i32, i32
  }
  func.func @transform_3(%arg0: i32, %arg1: i32, %arg2: memref<2xi32, #tpu.memory_space<smem>>) -> (i32, i32, i32) {
    %c0_i32 = arith.constant 0 : i32
    %c0_i32_0 = arith.constant 0 : i32
    return %arg0, %c0_i32, %arg1 : i32, i32, i32
  }
}

</mosaic_0001>

<llo_original>
// kernel: roi_label_proposals.1
$region0: #{roi_label_proposals.1}
  #allocation0 [shape = 'u32[]', space=smem, size = 0x4, offset = 0x4, fixed_abs, tag = 'smem constant byte address 0x4 - core index']
  #allocation1 [shape = 'u32[144,128]{1,0:T(1,128)}', space=vmem, size = 0x12000, scoped, tag = 'internal scratch']
  #allocation2 [shape = 's32[1]{0}', space=sflag, size = 0x4, scoped, tag = 'scoped memory for roi_label_proposals.1']
  #allocation3 [shape = 'u8[512]{0}', space=smem, size = 0x200, scoped, tag = 'prefetched SMEM operand 0']
  %s0 = inlined_call_operand.vmem [shape: s32[2], index: 0, kind: input, shape index: {}]
  %s1 = inlined_call_operand.vmem [shape: f32[2,8,4], index: 1, kind: input, shape index: {}]
  %s2 = inlined_call_operand.vmem [shape: f32[2,4,128], index: 2, kind: input, shape index: {}]
  %s3 = inlined_call_operand.vmem [shape: s32[2,8,1], index: 3, kind: input, shape index: {}]
  %s4 = inlined_call_operand.vmem [shape: s32[2,8,128], index: 4, kind: output, shape index: {}]
  %s5 = sld [smem:[#allocation0]]
  $region45: #{roi_label_proposals.1} parent=0
    _
  %s7 = ssub.s32 1, %s5
  %s8 = scalar_select 0, %s7, %s5
  %s9 = sshll.u32 %s0, 4
  %s10 = int_to_ptr.vmem [resolvable:$true] %s9
  %12 = dma.vmem_to_smem %s10, 16, [#allocation3], [#allocation2]
  %13 = dma.done [#allocation2], 16
  %14 = sfence
  loop: start=0, step=1, limit=4
  $region2: #{roi_label_proposals.1} parent=0 // loop_pre_header
    _
  $region3: #{roi_label_proposals.1} parent=0 // loop_header
    %s16 = sphi 0, %s20
    %p17 = scmp.ge.s32.totalorder %s16, 4
    %s23 = sphi 0, %s35
    %s24 = sphi 0, %s31
    %s25 = sphi 0, %s23
    %s26 = sphi 0, %s24
    %s27 = sphi 0, %s25
    %s28 = sphi 0, %s26
    %s38 = sphi 0, %s40
    %s41 = sphi 0, %s38
    %s42 = sphi 0, %s41
    %s58 = sphi 0, %s42
    %s66 = sphi 0, %s68
    %s69 = sphi 0, %s66
    %s70 = sphi 0, %s69
    %s86 = sphi 0, %s70
    %s92 = sphi 0, %s94
    %s95 = sphi 0, %s92
    %s96 = sphi 0, %s95
    %s112 = sphi 0, %s96
    %s120 = sphi 0, %s122
    %s123 = sphi 0, %s120
    %s124 = sphi 0, %s123
    %s140 = sphi 0, %s124
  $region4: #{roi_label_proposals.1} parent=0 // loop_header_branch
    %19 = sbr.rel (%p17) target = $region8
  $region5: #{roi_label_proposals.1} parent=0 // loop_body
    %s21 = ssub.s32 %s16, 1
    %s22 = ssub.s32 %s16, 2
    %s29 = sadd.s32 1, %s24
    %p30 = scmp.ge.s32.totalorder %s29, 1
    %s31 = scalar_select %p30, 0, %s29
    %s32 = sadd.s32 1, %s23
    %s33 = scalar_select %p30, %s32, %s23
    %p34 = scmp.ge.s32.totalorder %s33, 2
    %s35 = scalar_select %p34, 0, %s33
    %s36 = ssub.s32 %s23, %s35
    %p37 = scmp.eq.s32.totalorder %s36, 0
    %s39 = sadd.s32 %s38, 1
    %s40 = scalar_select %p37, %s38, %s39
    %p43 = pneg %p37
    %p44 = scmp.eq.s32.totalorder %s16, 1
    %p45 = por %p43, %p44
    %p46 = scmp.ne.s32.totalorder %s38, %s41
    %p47 = scmp.eq.s32.totalorder %s16, 0
    %p48 = por %p46, %p47
    %p49 = scmp.ne.s32.totalorder %s38, %s41
    %p50 = scmp.eq.s32.totalorder %s21, 1
    %p51 = por %p49, %p50
    %p52 = scmp.ne.s32.totalorder %s41, %s42
    %p53 = scmp.eq.s32.totalorder %s21, 0
    %p54 = por %p52, %p53
    %p55 = scmp.ne.s32.totalorder %s41, %s42
    %p56 = scmp.eq.s32.totalorder %s22, 1
    %p57 = por %p55, %p56
    %p59 = scmp.ne.s32.totalorder %s42, %s58
    %p60 = scmp.eq.s32.totalorder %s22, 0
    %p61 = por %p59, %p60
    %s62 = ssub.s32 %s23, %s35
    %s63 = ssub.s32 %s24, %s31
    %s64 = sor.u32 %s62, %s63
    %p65 = scmp.eq.s32.totalorder %s64, 0
    %s67 = sadd.s32 %s66, 1
    %s68 = scalar_select %p65, %s66, %s67
    %p71 = pneg %p65
    %p72 = scmp.eq.s32.totalorder %s16, 1
    %p73 = por %p71, %p72
    %p74 = scmp.ne.s32.totalorder %s66, %s69
    %p75 = scmp.eq.s32.totalorder %s16, 0
    %p76 = por %p74, %p75
    %p77 = scmp.ne.s32.totalorder %s66, %s69
    %p78 = scmp.eq.s32.totalorder %s21, 1
    %p79 = por %p77, %p78
    %p80 = scmp.ne.s32.totalorder %s69, %s70
    %p81 = scmp.eq.s32.totalorder %s21, 0
    %p82 = por %p80, %p81
    %p83 = scmp.ne.s32.totalorder %s69, %s70
    %p84 = scmp.eq.s32.totalorder %s22, 1
    %p85 = por %p83, %p84
    %p87 = scmp.ne.s32.totalorder %s70, %s86
    %p88 = scmp.eq.s32.totalorder %s22, 0
    %p89 = por %p87, %p88
    %s90 = ssub.s32 %s23, %s35
    %p91 = scmp.eq.s32.totalorder %s90, 0
    %s93 = sadd.s32 %s92, 1
    %s94 = scalar_select %p91, %s92, %s93
    %p97 = pneg %p91
    %p98 = scmp.eq.s32.totalorder %s16, 1
    %p99 = por %p97, %p98
    %p100 = scmp.ne.s32.totalorder %s92, %s95
    %p101 = scmp.eq.s32.totalorder %s16, 0
    %p102 = por %p100, %p101
    %p103 = scmp.ne.s32.totalorder %s92, %s95
    %p104 = scmp.eq.s32.totalorder %s21, 1
    %p105 = por %p103, %p104
    %p106 = scmp.ne.s32.totalorder %s95, %s96
    %p107 = scmp.eq.s32.totalorder %s21, 0
    %p108 = por %p106, %p107
    %p109 = scmp.ne.s32.totalorder %s95, %s96
    %p110 = scmp.eq.s32.totalorder %s22, 1
    %p111 = por %p109, %p110
    %p113 = scmp.ne.s32.totalorder %s96, %s112
    %p114 = scmp.eq.s32.totalorder %s22, 0
    %p115 = por %p113, %p114
    %s116 = ssub.s32 %s23, %s35
    %s117 = ssub.s32 %s24, %s31
    %s118 = sor.u32 %s116, %s117
    %p119 = scmp.eq.s32.totalorder %s118, 0
    %s121 = sadd.s32 %s120, 1
    %s122 = scalar_select %p119, %s120, %s121
    %p125 = pneg %p119
    %p126 = scmp.eq.s32.totalorder %s16, 1
    %p127 = por %p125, %p126
    %p128 = scmp.ne.s32.totalorder %s120, %s123
    %p129 = scmp.eq.s32.totalorder %s16, 0
    %p130 = por %p128, %p129
    %p131 = scmp.ne.s32.totalorder %s120, %s123
    %p132 = scmp.eq.s32.totalorder %s21, 1
    %p133 = por %p131, %p132
    %p134 = scmp.ne.s32.totalorder %s123, %s124
    %p135 = scmp.eq.s32.totalorder %s21, 0
    %p136 = por %p134, %p135
    %p137 = scmp.ne.s32.totalorder %s123, %s124
    %p138 = scmp.eq.s32.totalorder %s22, 1
    %p139 = por %p137, %p138
    %p141 = scmp.ne.s32.totalorder %s124, %s140
    %p142 = scmp.eq.s32.totalorder %s22, 0
    %p143 = por %p141, %p142
    %p144 = scmp.le.s32.totalorder 1, %s16
    %p145 = scmp.lt.s32.totalorder %s16, 3
    %p146 = pnand %p144, %p145
    %p147 = pneg %p146
    // Predicated region
    $region9: #{roi_label_proposals.1} parent=5 // pred_check
      _
    $region10: #{roi_label_proposals.1} parent=5 // pred_check_branch
      %149 = sbr.rel (%p146) target = $region12
    $region11: #{roi_label_proposals.1} parent=5 // pred_region
      %s150 = ssub.s32 %s16, 1
    $region12: #{roi_label_proposals.1} parent=5 // pred_fallthru
      _
    %p151 = scmp.lt.s32.totalorder %s16, 2
    // Predicated region
    $region13: #{roi_label_proposals.1} parent=5 // pred_check
      %p152 = pneg %p151
    $region14: #{roi_label_proposals.1} parent=5 // pred_check_branch
      %154 = sbr.rel (%p152) target = $region16
    $region15: #{roi_label_proposals.1} parent=5 // pred_region
      // Predicated region
      $region17: #{roi_label_proposals.1} parent=15 // pred_check
        %p155 = pneg %p48
      $region18: #{roi_label_proposals.1} parent=15 // pred_check_branch
        %157 = sbr.rel (%p155) target = $region20
      $region19: #{roi_label_proposals.1} parent=15 // pred_region
        %p158 = scmp.lt.s32.totalorder %s23, 1
        %s159 = scalar_select %p158, %s23, 1
        %s160 = smul.addr %s159, 8
        %s161 = scalar_lea.vmem %s1, %s160
      $region20: #{roi_label_proposals.1} parent=15 // pred_fallthru
        _
      // Predicated region
      $region21: #{roi_label_proposals.1} parent=15 // pred_check
        %p162 = pneg %p76
      $region22: #{roi_label_proposals.1} parent=15 // pred_check_branch
        %164 = sbr.rel (%p162) target = $region24
      $region23: #{roi_label_proposals.1} parent=15 // pred_region
        %p165 = scmp.lt.s32.totalorder %s23, 1
        %s166 = scalar_select %p165, %s23, 1
        %p167 = scmp.lt.s32.totalorder %s24, 0
        %s168 = scalar_select %p167, %s24, 0
        %s169 = sadd.s32 %s168, %s166
        %s170 = smul.addr %s169, 4
        %s171 = scalar_lea.vmem %s2, %s170
      $region24: #{roi_label_proposals.1} parent=15 // pred_fallthru
        _
      // Predicated region
      $region25: #{roi_label_proposals.1} parent=15 // pred_check
        %p172 = pneg %p102
      $region26: #{roi_label_proposals.1} parent=15 // pred_check_branch
        %174 = sbr.rel (%p172) target = $region28
      $region27: #{roi_label_proposals.1} parent=15 // pred_region
        %p175 = scmp.lt.s32.totalorder %s23, 1
        %s176 = scalar_select %p175, %s23, 1
        %s177 = smul.addr %s176, 8
        %s178 = scalar_lea.vmem %s3, %s177
      $region28: #{roi_label_proposals.1} parent=15 // pred_fallthru
        _
    $region16: #{roi_label_proposals.1} parent=5 // pred_fallthru
      _
    %p179 = scmp.le.s32.totalorder 1, %s16
    %p180 = scmp.lt.s32.totalorder %s16, 3
    %p181 = pnand %p179, %p180
    %p182 = pneg %p181
    // Predicated region
    $region29: #{roi_label_proposals.1} parent=5 // pred_check
      _
    $region30: #{roi_label_proposals.1} parent=5 // pred_check_branch
      %184 = sbr.rel (%p181) target = $region32
    $region31: #{roi_label_proposals.1} parent=5 // pred_region
      %s185 = ssub.s32 %s16, 1
      %p186 = scmp.lt.s32.totalorder %s25, 1
      %s187 = scalar_select %p186, %s25, 1
      %s188 = smul.addr %s187, 8
      %s189 = scalar_lea.vmem %s1, %s188
      %p190 = pneg %p54
      %p191 = pneg %p51
      %p192 = scmp.lt.s32.totalorder %s25, 1
      %s193 = scalar_select %p192, %s25, 1
      %p194 = scmp.lt.s32.totalorder %s26, 0
      %s195 = scalar_select %p194, %s26, 0
      %s196 = sadd.s32 %s195, %s193
      %s197 = smul.addr %s196, 4
      %s198 = scalar_lea.vmem %s2, %s197
      %p199 = pneg %p82
      %p200 = pneg %p79
      %p201 = scmp.lt.s32.totalorder %s25, 1
      %s202 = scalar_select %p201, %s25, 1
      %s203 = smul.addr %s202, 8
      %s204 = scalar_lea.vmem %s3, %s203
      %p205 = pneg %p108
      %p206 = pneg %p105
      %p207 = pneg %p136
      %p208 = pneg %p133
      %p209 = scmp.lt.s32.totalorder %s25, 1
      %s210 = scalar_select %p209, %s25, 1
      %p211 = scmp.lt.s32.totalorder %s26, 0
      %s212 = scalar_select %p211, %s26, 0
      %s213 = sadd.s32 %s212, %s210
      %s214 = smul.addr %s213, 8
      %s215 = scalar_lea.vmem %s4, %s214
      %p216 = scmp.lt.s32.totalorder %s25, 1
      %s217 = scalar_select %p216, %s25, 1
      %s218 = smul.addr %s217, 8
      %s219 = scalar_lea.vmem %s1, %s218
      %p220 = scmp.lt.s32.totalorder %s25, 1
      %s221 = scalar_select %p220, %s25, 1
      %p222 = scmp.lt.s32.totalorder %s26, 0
      %s223 = scalar_select %p222, %s26, 0
      %s224 = sadd.s32 %s223, %s221
      %s225 = smul.addr %s224, 4
      %s226 = scalar_lea.vmem %s2, %s225
      %p227 = scmp.lt.s32.totalorder %s25, 1
      %s228 = scalar_select %p227, %s25, 1
      %s229 = smul.addr %s228, 8
      %s230 = scalar_lea.vmem %s3, %s229
      %p231 = scmp.lt.s32.totalorder %s25, 1
      %s232 = scalar_select %p231, %s25, 1
      %p233 = scmp.lt.s32.totalorder %s26, 0
      %s234 = scalar_select %p233, %s26, 0
      %s235 = sadd.s32 %s234, %s232
      %s236 = smul.addr %s235, 8
      %s237 = scalar_lea.vmem %s4, %s236
      %s238 = sld [smem:[#allocation3 + %s25]]
      %v239 = vld [vmem:[%s219] sm:$0xff]
      %v240 = vld [vmem:[%s226] sm:$0xf]
      %v241 = vld [vmem:[%s230] sm:$0xff]
      %243 = vrot.lane.b32.xlu0 %v239, 2
      %v244 = vpop.permute.xlu0 %243
      %v246 = vsub.f32 %v239, %v244
      %248 = vrot.lane.b32.xlu0 %v246, 127
      %v249 = vpop.permute.xlu0 %248
      %v251 = vmul.f32 %v246, %v249
      %v253 = vrot.slane %v240, 6
      %v255 = vsub.f32 %v240, %v253
      %v257 = vrot.slane %v255, 1
      %v259 = vmul.f32 %v255, %v257
      %260 = vset.pattern.permute.xlu0 2
      %261 = vperm.xlu0 %260, %v239
      %v262 = vpop.permute.xlu0 %261
      %v264 = vlaneseq
      %v265 = vshrl.u32 %v264, 7
      %v266 = vsub.s32 2, %v265
      %v267 = vrot.slane %v240, %v266
      %v268 = vmin.f32 %v262, %v267
      %269 = vset.pattern.permute.xlu0 0
      %270 = vperm.xlu0 %269, %v239
      %v271 = vpop.permute.xlu0 %270
      %v273 = vlaneseq
      %v274 = vshrl.u32 %v273, 7
      %v275 = vsub.s32 0, %v274
      %v276 = vrot.slane %v240, %v275
      %v277 = vmax.f32 %v271, %v276
      %v278 = vsub.f32 %v268, %v277
      %v279 = vmax.f32 %v278, 0.0
      %280 = vset.pattern.permute.xlu0 3
      %281 = vperm.xlu0 %280, %v239
      %v282 = vpop.permute.xlu0 %281
      %v284 = vlaneseq
      %v285 = vshrl.u32 %v284, 7
      %v286 = vsub.s32 3, %v285
      %v287 = vrot.slane %v240, %v286
      %v288 = vmin.f32 %v282, %v287
      %289 = vset.pattern.permute.xlu0 1
      %290 = vperm.xlu0 %289, %v239
      %v291 = vpop.permute.xlu0 %290
      %v293 = vlaneseq
      %v294 = vshrl.u32 %v293, 7
      %v295 = vsub.s32 1, %v294
      %v296 = vrot.slane %v240, %v295
      %v297 = vmax.f32 %v291, %v296
      %v298 = vsub.f32 %v288, %v297
      %v299 = vmax.f32 %v298, 0.0
      %v300 = vmul.f32 %v279, %v299
      %302 = vset.pattern.permute.xlu0 2
      %303 = vperm.xlu0 %302, %v251
      %v304 = vpop.permute.xlu0 %303
      %v306 = vlaneseq
      %v307 = vshrl.u32 %v306, 7
      %v308 = vsub.s32 2, %v307
      %v309 = vrot.slane %v259, %v308
      %v310 = vadd.f32 %v304, %v309
      %v311 = vsub.f32 %v310, %v300
      %vm312 = vcmp.gt.f32.partialorder %v300, 0.0
      %v313 = vsel %vm312, %v311, 1.0
      %v314 = vrcp.pop %v313
      %v315 = vmul.f32 %v300, %v314
      %v316 = vsel %vm312, %v315, 0.0
      %v317 = vlaneseq
      %v318 = vshrl.u32 %v317, 7
      %v319 = vstv %s238
      %vm320 = vcmp.lt.s32.totalorder %v318, %v319
      %v321 = vsel %vm320, %v316, -1.0
      %v322 = vrot.slane %v321, 4
      %v323 = vmax.f32 %v321, %v322
      %v324 = vrot.slane %v323, 2
      %v325 = vmax.f32 %v323, %v324
      %v326 = vrot.slane %v325, 1
      %v327 = vmax.f32 %v325, %v326
      %vm328 = vcmp.eq.f32.partialorder %v321, %v327
      %v329 = vshll.u32 %v318, 8
      %330 = vset.pattern.permute.xlu0 0
      %331 = vperm.xlu0 %330, %v241
      %v332 = vpop.permute.xlu0 %331
      %v333 = vor.u32 %v329, %v332
      %v334 = vsel %vm328, %v333, 1073741824
      %v335 = vrot.slane %v334, 4
      %vm336 = vcmp.lt.s32.totalorder %v334, %v335
      %v337 = vsel %vm336, %v334, %v335
      %v338 = vrot.slane %v337, 2
      %vm339 = vcmp.lt.s32.totalorder %v337, %v338
      %v340 = vsel %vm339, %v337, %v338
      %v341 = vrot.slane %v340, 1
      %vm342 = vcmp.lt.s32.totalorder %v340, %v341
      %v343 = vsel %vm342, %v340, %v341
      %v344 = vshra.s32 %v343, 8
      %v345 = vand.u32 %v343, 255
      %vm346 = vcmp.ge.f32.partialorder %v327, 0.5
      %v347 = vsel %vm346, 1, 0
      %vm348 = vcmp.eq.s32.totalorder %v347, 0
      %v349 = vsel %vm348, 8, %v345
      %vm350 = vcmp.eq.s32.totalorder %v347, 4294967295
      %v351 = vsel %vm350, 4294967295, %v349
      %vm352 = vcmp.eq.s32.totalorder %v318, 0
      %v353 = vsel %vm352, %v344, 0
      %vm354 = vcmp.eq.s32.totalorder %v318, 1
      %v355 = vsel %vm354, %v347, %v353
      %vm356 = vcmp.eq.s32.totalorder %v318, 2
      %v357 = vsel %vm356, %v351, %v355
      %358 = vst [vmem:[%s237] sm:$0xff] %v357
      %p359 = scmp.lt.s32.totalorder %s25, 1
      %s360 = scalar_select %p359, %s25, 1
      %p361 = scmp.lt.s32.totalorder %s26, 0
      %s362 = scalar_select %p361, %s26, 0
      %s363 = sadd.s32 %s362, %s360
      %s364 = smul.addr %s363, 8
      %s365 = scalar_lea.vmem %s4, %s364
      // Predicated region
      $region33: #{roi_label_proposals.1} parent=31 // pred_check
        %p366 = pneg %p133
      $region34: #{roi_label_proposals.1} parent=31 // pred_check_branch
        %368 = sbr.rel (%p366) target = $region36
      $region35: #{roi_label_proposals.1} parent=31 // pred_region
        _
      $region36: #{roi_label_proposals.1} parent=31 // pred_fallthru
        _
    $region32: #{roi_label_proposals.1} parent=5 // pred_fallthru
      _
    %p369 = scmp.le.s32.totalorder 2, %s16
    // Predicated region
    $region37: #{roi_label_proposals.1} parent=5 // pred_check
      %p370 = pneg %p369
    $region38: #{roi_label_proposals.1} parent=5 // pred_check_branch
      %372 = sbr.rel (%p370) target = $region40
    $region39: #{roi_label_proposals.1} parent=5 // pred_region
      %s373 = ssub.s32 %s16, 2
      // Predicated region
      $region41: #{roi_label_proposals.1} parent=39 // pred_check
        %p374 = pneg %p139
      $region42: #{roi_label_proposals.1} parent=39 // pred_check_branch
        %376 = sbr.rel (%p374) target = $region44
      $region43: #{roi_label_proposals.1} parent=39 // pred_region
        %p377 = scmp.lt.s32.totalorder %s27, 1
        %s378 = scalar_select %p377, %s27, 1
        %p379 = scmp.lt.s32.totalorder %s28, 0
        %s380 = scalar_select %p379, %s28, 0
        %s381 = sadd.s32 %s380, %s378
        %s382 = smul.addr %s381, 8
        %s383 = scalar_lea.vmem %s4, %s382
      $region44: #{roi_label_proposals.1} parent=39 // pred_fallthru
        _
    $region40: #{roi_label_proposals.1} parent=5 // pred_fallthru
      _
  $region6: #{roi_label_proposals.1} parent=0 // loop_footer
    %s20 = sadd.s32 1, %s16
  $region7: #{roi_label_proposals.1} parent=0 // loop_footer_branch
    %15 = sbr.rel target = $region3
  $region8: #{roi_label_proposals.1} parent=0 // loop_exit
    _

</llo_original>
